<compile_context>
chip_gen: v7x
topology: tpu7x:2x2x1
jax: 0.10.0
libtpu: 0.0.40
codegen_flags: <defaults>
</compile_context>

<pallas_src>
import functools

import jax
import jax.numpy as jnp
from jax import lax
from jax.experimental import pallas as pl
from jax.experimental.pallas import tpu as pltpu

LANES = 128
SUBLANES = 8
MAX_ROW_TILE = 8192            # rows per grid step: 4 MiB per f32 input tile
CHUNK_ROWS = 512               # in-kernel sub-chunk: keeps elementwise temps ~<1.5 MiB
ACC_ROWS_MAX = 64              # 8 independent (8,128) accumulation chains
VMEM_LIMIT_BYTES = 36 * 1024 * 1024  # 24 MiB buffers + temps + headroom (< all chips' VMEM)


def _num_tensorcores():
    """Best-effort TensorCores-per-chip; returns 1 if unknown (always safe)."""
    try:
        info = pltpu.get_tpu_info()
    except Exception:
        info = None
    if info is not None:
        for name in ("num_cores", "core_count", "num_tensorcores",
                     "tensorcore_count", "cores_per_chip", "num_cores_per_chip"):
            v = getattr(info, name, None)
            if isinstance(v, int) and v >= 1:
                return v
    try:
        v = getattr(jax.devices()[0], "num_cores", None)
        if isinstance(v, int) and v >= 1:
            return v
    except Exception:
        pass
    return 1


def _wl1_kernel(p_ref, t_ref, w_ref, o_ref, acc_ref, *,
                chunks, acc_rows, row_tile, rows_total,
                blocks_per_core, num_blocks, mask_needed):
    c = pl.program_id(0)   # core-split axis
    s = pl.program_id(1)   # reduction axis

    @pl.when(s == 0)
    def _():
        acc_ref[...] = jnp.zeros_like(acc_ref)

    def tile_partial(masked):
        # Process the (row_tile, 128) tile in small row chunks so elementwise
        # temporaries stay small; fold each chunk onto an (acc_rows, 128) partial
        # (pure VALU adds across independent sublane-group chains).
        part = jnp.zeros((acc_rows, LANES), jnp.float32)
        if masked:
            base = (c * blocks_per_core + s) * row_tile
        for off, size in chunks:
            p = p_ref[pl.ds(off, size), :].astype(jnp.float32)
            t = t_ref[pl.ds(off, size), :].astype(jnp.float32)
            w = w_ref[pl.ds(off, size), :].astype(jnp.float32)
            val = jnp.abs(p - t) * w
            if masked:
                row_ids = base + off + lax.broadcasted_iota(jnp.int32, (size, 1), 0)
                val = jnp.where(row_ids < rows_total, val, 0.0)
            part = part + jnp.sum(val.reshape(size // acc_rows, acc_rows, LANES),
                                  axis=0)
        return part

    if mask_needed:
        # Only the last real block (ragged overhang) and any clamped duplicate
        # blocks need masking; all interior blocks take the unmasked fast path.
        blk = c * blocks_per_core + s
        is_edge = blk >= (num_blocks - 1)

        @pl.when(jnp.logical_not(is_edge))
        def _():
            acc_ref[...] += tile_partial(masked=False)

        @pl.when(is_edge)
        def _():
            acc_ref[...] += tile_partial(masked=True)
    else:
        acc_ref[...] += tile_partial(masked=False)

    @pl.when(s == pl.num_programs(1) - 1)
    def _():
        o_ref[...] = acc_ref[...]


@jax.jit
def weighted_l1_loss(prediction, target, weight):
    """mean(|prediction - target| * weight); semantics match the PyTorch module."""
    assert prediction.shape == target.shape == weight.shape
    n_total = prediction.size  # mean over ALL elements (torch.mean)

    pf = prediction.reshape(-1)
    tf = target.reshape(-1)
    wf = weight.reshape(-1)

    # A lane-dense (rows, 128) view is copy-free only when numel % 128 == 0
    # (the common case, incl. the test shape). Otherwise pad just to the next
    # multiple of 128 (padded weight == 0 => zero contribution).
    # TODO(synk): replace this pad with a manual-DMA ragged tail to make the
    # unaligned case fully copy-free as well.
    n_pad = (-n_total) % LANES
    if n_pad:
        pf = jnp.pad(pf, (0, n_pad))
        tf = jnp.pad(tf, (0, n_pad))
        wf = jnp.pad(wf, (0, n_pad))

    rows = (n_total + n_pad) // LANES
    p2 = pf.reshape(rows, LANES)
    t2 = tf.reshape(rows, LANES)
    w2 = wf.reshape(rows, LANES)

    # Accumulator height: up to 64 rows (8 independent (8,128) chains).
    if rows >= ACC_ROWS_MAX:
        acc_rows = ACC_ROWS_MAX
    elif rows >= SUBLANES:
        acc_rows = (rows // SUBLANES) * SUBLANES
    else:
        acc_rows = rows

    # Row tile: biggest multiple of acc_rows up to MAX_ROW_TILE.
    if rows >= MAX_ROW_TILE:
        row_tile = MAX_ROW_TILE
    else:
        row_tile = (rows // acc_rows) * acc_rows

    # Static in-kernel chunk schedule (all chunk sizes are multiples of acc_rows).
    chunks = []
    off = 0
    while off < row_tile:
        size = min(CHUNK_ROWS, row_tile - off)
        chunks.append((off, size))
        off += size
    chunks = tuple(chunks)

    num_blocks = pl.cdiv(rows, row_tile)

    num_cores = max(1, min(_num_tensorcores(), num_blocks))
    blocks_per_core = pl.cdiv(num_blocks, num_cores)
    mask_needed = (num_cores * blocks_per_core * row_tile) != rows

    def in_map(c, s):
        # Clamp so the DMA'd block start always lies inside the array; duplicated /
        # overhanging blocks are zeroed by the in-kernel row mask.
        return (jnp.minimum(c * blocks_per_core + s, num_blocks - 1), 0)

    kernel = functools.partial(
        _wl1_kernel,
        chunks=chunks,
        acc_rows=acc_rows,
        row_tile=row_tile,
        rows_total=rows,
        blocks_per_core=blocks_per_core,
        num_blocks=num_blocks,
        mask_needed=mask_needed,
    )

    if num_cores > 1:
        core_sem = getattr(pltpu, "CORE_PARALLEL", pltpu.PARALLEL)
    else:
        core_sem = pltpu.ARBITRARY

    itemsize = jnp.dtype(prediction.dtype).itemsize
    bytes_in = 3 * rows * LANES * itemsize
    bytes_out = num_cores * acc_rows * LANES * 4

    partials = pl.pallas_call(
        kernel,
        out_shape=jax.ShapeDtypeStruct((num_cores * acc_rows, LANES), jnp.float32),
        grid_spec=pltpu.PrefetchScalarGridSpec(
            num_scalar_prefetch=0,
            grid=(num_cores, blocks_per_core),
            in_specs=[pl.BlockSpec((row_tile, LANES), in_map) for _ in range(3)],
            out_specs=pl.BlockSpec((acc_rows, LANES), lambda c, s: (c, 0)),
            scratch_shapes=[pltpu.VMEM((acc_rows, LANES), jnp.float32)],
        ),
        compiler_params=pltpu.CompilerParams(
            dimension_semantics=(core_sem, pltpu.ARBITRARY),
            vmem_limit_bytes=VMEM_LIMIT_BYTES,
        ),
        cost_estimate=pl.CostEstimate(
            flops=4 * n_total,           # sub + abs + mul + add
            transcendentals=0,
            bytes_accessed=bytes_in + bytes_out,
        ),
    )(p2, t2, w2)

    # Final tiny cross-lane reduce + mean in plain JAX.
    return jnp.sum(partials) / jnp.float32(n_total)


if __name__ == "__main__":
    key = jax.random.PRNGKey(0)
    k1, k2, k3 = jax.random.split(key, 3)

    # NCHW, small shapes: batch=2, channels=4, spatial=16x16
    shape = (2, 4, 16, 16)
    prediction = jax.random.normal(k1, shape, dtype=jnp.float32)
    target = jax.random.normal(k2, shape, dtype=jnp.float32)
    weight = jax.random.uniform(k3, shape, dtype=jnp.float32)

    loss = weighted_l1_loss(prediction, target, weight)
    jax.block_until_ready(loss)

    # Reference check (plain JAX)
    ref = jnp.mean(jnp.abs(prediction - target) * weight)
    assert jnp.allclose(loss, ref, rtol=1e-5, atol=1e-6), (loss, ref)

    print("KERNEL_OK")
</pallas_src>

<mosaic_0001>
module attributes {stable_mosaic.version = 11 : i64} {
  func.func @_wl1_kernel(%arg0: i32, %arg1: i32, %arg2: memref<16x128xf32, #tpu.memory_space<vmem>>, %arg3: memref<16x128xf32, #tpu.memory_space<vmem>>, %arg4: memref<16x128xf32, #tpu.memory_space<vmem>>, %arg5: memref<16x128xf32, #tpu.memory_space<vmem>>, %arg6: memref<16x128xf32, #tpu.memory_space<vmem>>) attributes {dimension_semantics = [#tpu.dimension_semantics<arbitrary>, #tpu.dimension_semantics<arbitrary>], iteration_bounds = array<i64: 1, 1>, scalar_prefetch = 0 : i64, scratch_operands = 1 : i64, tpu.core_type = #tpu.core_type<tc>, window_params = [{transform_indices = @transform_0, window_bounds = array<i64: 16, 128>}, {transform_indices = @transform_1, window_bounds = array<i64: 16, 128>}, {transform_indices = @transform_2, window_bounds = array<i64: 16, 128>}, {transform_indices = @transform_3, window_bounds = array<i64: 16, 128>}]} {
    %c0_i32 = arith.constant 0 : i32
    %0 = arith.cmpi eq, %arg1, %c0_i32 : i32
    %1 = arith.extui %0 : i1 to i32
    %c0_i32_0 = arith.constant 0 : i32
    %2 = arith.cmpi ne, %1, %c0_i32_0 : i32
    scf.if %2 {
      %cst_13 = arith.constant 0.000000e+00 : f32
      %19 = vector.broadcast %cst_13 : f32 to vector<16x128xf32>
      %c0_14 = arith.constant 0 : index
      %c0_15 = arith.constant 0 : index
      %20 = vector.load %arg6[%c0_14, %c0_15] : memref<16x128xf32, #tpu.memory_space<vmem>>, vector<16x128xf32>
      tpu.vector_store %arg6[%c0_14, %c0_15], %19 {strides = array<i32>} : memref<16x128xf32, #tpu.memory_space<vmem>>, vector<16x128xf32>,
    } else {
    }
    %c0 = arith.constant 0 : index
    %c0_1 = arith.constant 0 : index
    %3 = vector.load %arg6[%c0, %c0_1] : memref<16x128xf32, #tpu.memory_space<vmem>>, vector<16x128xf32>
    %cst = arith.constant 0.000000e+00 : f32
    %4 = vector.broadcast %cst : f32 to vector<16x128xf32>
    %c0_2 = arith.constant 0 : index
    %c0_3 = arith.constant 0 : index
    %5 = vector.load %arg2[%c0_2, %c0_3] : memref<16x128xf32, #tpu.memory_space<vmem>>, vector<16x128xf32>
    %c0_4 = arith.constant 0 : index
    %c0_5 = arith.constant 0 : index
    %6 = vector.load %arg3[%c0_4, %c0_5] : memref<16x128xf32, #tpu.memory_space<vmem>>, vector<16x128xf32>
    %c0_6 = arith.constant 0 : index
    %c0_7 = arith.constant 0 : index
    %7 = vector.load %arg4[%c0_6, %c0_7] : memref<16x128xf32, #tpu.memory_space<vmem>>, vector<16x128xf32>
    %8 = arith.subf %5, %6 : vector<16x128xf32>
    %9 = math.absf %8 : vector<16x128xf32>
    %10 = arith.mulf %9, %7 : vector<16x128xf32>
    %11 = vector.shape_cast %10 : vector<16x128xf32> to vector<1x16x128xf32>
    %cst_8 = arith.constant dense<0.000000e+00> : vector<16x128xf32>
    %12 = vector.multi_reduction <add>, %11, %cst_8 [0] : vector<1x16x128xf32> to vector<16x128xf32>
    %13 = arith.addf %4, %12 : vector<16x128xf32>
    %14 = arith.addf %3, %13 : vector<16x128xf32>
    %c0_9 = arith.constant 0 : index
    %c0_10 = arith.constant 0 : index
    %15 = vector.load %arg6[%c0_9, %c0_10] : memref<16x128xf32, #tpu.memory_space<vmem>>, vector<16x128xf32>
    tpu.vector_store %arg6[%c0_9, %c0_10], %14 {strides = array<i32>} : memref<16x128xf32, #tpu.memory_space<vmem>>, vector<16x128xf32>,
    %c0_i32_11 = arith.constant 0 : i32
    %16 = arith.cmpi eq, %arg1, %c0_i32_11 : i32
    %17 = arith.extui %16 : i1 to i32
    %c0_i32_12 = arith.constant 0 : i32
    %18 = arith.cmpi ne, %17, %c0_i32_12 : i32
    scf.if %18 {
      %c0_13 = arith.constant 0 : index
      %c0_14 = arith.constant 0 : index
      %19 = vector.load %arg6[%c0_13, %c0_14] : memref<16x128xf32, #tpu.memory_space<vmem>>, vector<16x128xf32>
      %c0_15 = arith.constant 0 : index
      %c0_16 = arith.constant 0 : index
      %20 = vector.load %arg5[%c0_15, %c0_16] : memref<16x128xf32, #tpu.memory_space<vmem>>, vector<16x128xf32>
      tpu.vector_store %arg5[%c0_15, %c0_16], %19 {strides = array<i32>} : memref<16x128xf32, #tpu.memory_space<vmem>>, vector<16x128xf32>,
    } else {
    }
    return
  }
  func.func @transform_0(%arg0: i32, %arg1: i32) -> (i32, i32) {
    %c1_i32 = arith.constant 1 : i32
    %0 = arith.muli %arg0, %c1_i32 : i32
    %1 = arith.addi %0, %arg1 : i32
    %c0_i32 = arith.constant 0 : i32
    %2 = arith.minsi %1, %c0_i32 : i32
    %c0_i32_0 = arith.constant 0 : i32
    %c0_i32_1 = arith.constant 0 : i32
    return %2, %c0_i32_0 : i32, i32
  }
  func.func @transform_1(%arg0: i32, %arg1: i32) -> (i32, i32) {
    %c1_i32 = arith.constant 1 : i32
    %0 = arith.muli %arg0, %c1_i32 : i32
    %1 = arith.addi %0, %arg1 : i32
    %c0_i32 = arith.constant 0 : i32
    %2 = arith.minsi %1, %c0_i32 : i32
    %c0_i32_0 = arith.constant 0 : i32
    %c0_i32_1 = arith.constant 0 : i32
    return %2, %c0_i32_0 : i32, i32
  }
  func.func @transform_2(%arg0: i32, %arg1: i32) -> (i32, i32) {
    %c1_i32 = arith.constant 1 : i32
    %0 = arith.muli %arg0, %c1_i32 : i32
    %1 = arith.addi %0, %arg1 : i32
    %c0_i32 = arith.constant 0 : i32
    %2 = arith.minsi %1, %c0_i32 : i32
    %c0_i32_0 = arith.constant 0 : i32
    %c0_i32_1 = arith.constant 0 : i32
    return %2, %c0_i32_0 : i32, i32
  }
  func.func @transform_3(%arg0: i32, %arg1: i32) -> (i32, i32) {
    %c0_i32 = arith.constant 0 : i32
    %c0_i32_0 = arith.constant 0 : i32
    return %arg0, %c0_i32 : i32, i32
  }
}

</mosaic_0001>

<llo_original>
// kernel: weighted_l1_loss.1
$region0: #{weighted_l1_loss.1}
  #allocation0 [shape = 'u32[]', space=smem, size = 0x4, offset = 0x4, fixed_abs, tag = 'smem constant byte address 0x4 - core index']
  #allocation1 [shape = 'u32[144,128]{1,0:T(1,128)}', space=vmem, size = 0x12000, scoped, tag = 'internal scratch']
  #allocation2 [shape = 'f32[16,128]{1,0:T(8,128)}', space=vmem, size = 0x2000, scoped, tag = 'scratch operand']
  %s0 = inlined_call_operand.vmem [shape: f32[16,128], index: 0, kind: input, shape index: {}]
  %s1 = inlined_call_operand.vmem [shape: f32[16,128], index: 1, kind: input, shape index: {}]
  %s2 = inlined_call_operand.vmem [shape: f32[16,128], index: 2, kind: input, shape index: {}]
  %s3 = inlined_call_operand.vmem [shape: f32[16,128], index: 3, kind: output, shape index: {}]
  %s4 = sld [smem:[#allocation0]]
  $region30: #{weighted_l1_loss.1} parent=0
    _
  %s6 = ssub.s32 1, %s4
  %s7 = scalar_select 0, %s6, %s4
  // Predicated region
  $region2: #{weighted_l1_loss.1} parent=0 // pred_check
    _
  $region3: #{weighted_l1_loss.1} parent=0 // pred_check_branch
    %9 = sbr.rel (0) target = $region5
  $region4: #{weighted_l1_loss.1} parent=0 // pred_region
    %s10 = sadd.s32 0, 0
    %p11 = scmp.lt.s32.totalorder %s10, 0
    %s12 = scalar_select %p11, %s10, 0
    %s13 = smul.u32 2, %s12
    %p14 = scmp.lt.s32.totalorder %s13, 1
    %s15 = scalar_select %p14, %s13, 1
    %s16 = smul.addr %s15, 8
    %s17 = scalar_lea.vmem %s0, %s16
    %s18 = sadd.s32 0, 0
    %p19 = scmp.lt.s32.totalorder %s18, 0
    %s20 = scalar_select %p19, %s18, 0
    %s21 = smul.u32 2, %s20
  $region5: #{weighted_l1_loss.1} parent=0 // pred_fallthru
    _
  // Predicated region
  $region6: #{weighted_l1_loss.1} parent=0 // pred_check
    _
  $region7: #{weighted_l1_loss.1} parent=0 // pred_check_branch
    %23 = sbr.rel (0) target = $region9
  $region8: #{weighted_l1_loss.1} parent=0 // pred_region
    %s24 = sadd.s32 0, 0
    %p25 = scmp.lt.s32.totalorder %s24, 0
    %s26 = scalar_select %p25, %s24, 0
    %s27 = smul.u32 2, %s26
    %p28 = scmp.lt.s32.totalorder %s27, 1
    %s29 = scalar_select %p28, %s27, 1
    %s30 = smul.addr %s29, 8
    %s31 = scalar_lea.vmem %s1, %s30
    %s32 = sadd.s32 0, 0
    %p33 = scmp.lt.s32.totalorder %s32, 0
    %s34 = scalar_select %p33, %s32, 0
    %s35 = smul.u32 2, %s34
  $region9: #{weighted_l1_loss.1} parent=0 // pred_fallthru
    _
  // Predicated region
  $region10: #{weighted_l1_loss.1} parent=0 // pred_check
    _
  $region11: #{weighted_l1_loss.1} parent=0 // pred_check_branch
    %37 = sbr.rel (0) target = $region13
  $region12: #{weighted_l1_loss.1} parent=0 // pred_region
    %s38 = sadd.s32 0, 0
    %p39 = scmp.lt.s32.totalorder %s38, 0
    %s40 = scalar_select %p39, %s38, 0
    %s41 = smul.u32 2, %s40
    %p42 = scmp.lt.s32.totalorder %s41, 1
    %s43 = scalar_select %p42, %s41, 1
    %s44 = smul.addr %s43, 8
    %s45 = scalar_lea.vmem %s2, %s44
    %s46 = sadd.s32 0, 0
    %p47 = scmp.lt.s32.totalorder %s46, 0
    %s48 = scalar_select %p47, %s46, 0
    %s49 = smul.u32 2, %s48
  $region13: #{weighted_l1_loss.1} parent=0 // pred_fallthru
    _
  %s50 = sadd.s32 0, 0
  %p51 = scmp.lt.s32.totalorder %s50, 0
  %s52 = scalar_select %p51, %s50, 0
  %s53 = smul.u32 2, %s52
  %p54 = scmp.lt.s32.totalorder %s53, 1
  %s55 = scalar_select %p54, %s53, 1
  %s56 = smul.addr %s55, 8
  %s57 = scalar_lea.vmem %s0, %s56
  %s58 = sadd.s32 0, 0
  %p59 = scmp.lt.s32.totalorder %s58, 0
  %s60 = scalar_select %p59, %s58, 0
  %s61 = smul.u32 2, %s60
  %p62 = scmp.lt.s32.totalorder %s61, 1
  %s63 = scalar_select %p62, %s61, 1
  %s64 = smul.addr %s63, 8
  %s65 = scalar_lea.vmem %s1, %s64
  %s66 = sadd.s32 0, 0
  %p67 = scmp.lt.s32.totalorder %s66, 0
  %s68 = scalar_select %p67, %s66, 0
  %s69 = smul.u32 2, %s68
  %p70 = scmp.lt.s32.totalorder %s69, 1
  %s71 = scalar_select %p70, %s69, 1
  %s72 = smul.addr %s71, 8
  %s73 = scalar_lea.vmem %s2, %s72
  %s74 = sadd.s32 0, 0
  %p75 = scmp.lt.s32.totalorder %s74, 0
  %s76 = scalar_select %p75, %s74, 0
  %s77 = smul.u32 2, %s76
  %p78 = scmp.lt.s32.totalorder %s77, 1
  %s79 = scalar_select %p78, %s77, 1
  %s80 = smul.addr %s79, 8
  %s81 = scalar_lea.vmem %s0, %s80
  %s82 = sadd.s32 0, 0
  %p83 = scmp.lt.s32.totalorder %s82, 0
  %s84 = scalar_select %p83, %s82, 0
  %s85 = smul.u32 2, %s84
  %s86 = sadd.s32 0, 0
  %p87 = scmp.lt.s32.totalorder %s86, 0
  %s88 = scalar_select %p87, %s86, 0
  %s89 = smul.u32 2, %s88
  %p90 = scmp.lt.s32.totalorder %s89, 1
  %s91 = scalar_select %p90, %s89, 1
  %s92 = smul.addr %s91, 8
  %s93 = scalar_lea.vmem %s1, %s92
  %s94 = sadd.s32 0, 0
  %p95 = scmp.lt.s32.totalorder %s94, 0
  %s96 = scalar_select %p95, %s94, 0
  %s97 = smul.u32 2, %s96
  %s98 = sadd.s32 0, 0
  %p99 = scmp.lt.s32.totalorder %s98, 0
  %s100 = scalar_select %p99, %s98, 0
  %s101 = smul.u32 2, %s100
  %p102 = scmp.lt.s32.totalorder %s101, 1
  %s103 = scalar_select %p102, %s101, 1
  %s104 = smul.addr %s103, 8
  %s105 = scalar_lea.vmem %s2, %s104
  %s106 = sadd.s32 0, 0
  %p107 = scmp.lt.s32.totalorder %s106, 0
  %s108 = scalar_select %p107, %s106, 0
  %s109 = smul.u32 2, %s108
  %p110 = scmp.eq.s32.totalorder 0, 0
  // Predicated region
  $region14: #{weighted_l1_loss.1} parent=0 // pred_check
    %p111 = pneg %p110
  $region15: #{weighted_l1_loss.1} parent=0 // pred_check_branch
    %113 = sbr.rel (%p111) target = $region17
  $region16: #{weighted_l1_loss.1} parent=0 // pred_region
    %114 = vst [vmem:[#allocation2] sm:$0xff] 0.0
    %115 = vst [vmem:[#allocation2 + $0x8] sm:$0xff] 0.0
  $region17: #{weighted_l1_loss.1} parent=0 // pred_fallthru
    _
  %v116 = vld [vmem:[#allocation2] sm:$0xff]
  %v117 = vld [vmem:[#allocation2 + $0x8] sm:$0xff]
  %v118 = vld [vmem:[%s81] sm:$0xff]
  %v119 = vld [vmem:[%s81 + $0x8] sm:$0xff]
  %v120 = vld [vmem:[%s93] sm:$0xff]
  %v121 = vld [vmem:[%s93 + $0x8] sm:$0xff]
  %v122 = vld [vmem:[%s105] sm:$0xff]
  %v123 = vld [vmem:[%s105 + $0x8] sm:$0xff]
  %v124 = vsub.f32 %v118, %v120
  %v125 = vsub.f32 %v119, %v121
  %v126 = vand.u32 2147483647, %v124
  %v127 = vand.u32 2147483647, %v125
  %v128 = vmul.f32 %v126, %v122
  %v129 = vmul.f32 %v127, %v123
  %v130 = vadd.f32 %v128, 0.0
  %v131 = vadd.f32 %v129, 0.0
  %v132 = vadd.f32 %v130, 0.0
  %v133 = vadd.f32 %v131, 0.0
  %v134 = vadd.f32 %v116, %v132
  %v135 = vadd.f32 %v117, %v133
  %136 = vst [vmem:[#allocation2] sm:$0xff] %v134
  %137 = vst [vmem:[#allocation2 + $0x8] sm:$0xff] %v135
  // Predicated region
  $region18: #{weighted_l1_loss.1} parent=0 // pred_check
    %p138 = pneg %p110
  $region19: #{weighted_l1_loss.1} parent=0 // pred_check_branch
    %140 = sbr.rel (%p138) target = $region21
  $region20: #{weighted_l1_loss.1} parent=0 // pred_region
    %v141 = vld [vmem:[#allocation2] sm:$0xff]
    %v142 = vld [vmem:[#allocation2 + $0x8] sm:$0xff]
    %143 = vst [vmem:[%s3] sm:$0xff] %v141
    %144 = vst [vmem:[%s3 + $0x8] sm:$0xff] %v142
  $region21: #{weighted_l1_loss.1} parent=0 // pred_fallthru
    _
  // Predicated region
  $region22: #{weighted_l1_loss.1} parent=0 // pred_check
    _
  $region23: #{weighted_l1_loss.1} parent=0 // pred_check_branch
    %146 = sbr.rel (0) target = $region25
  $region24: #{weighted_l1_loss.1} parent=0 // pred_region
    _
  $region25: #{weighted_l1_loss.1} parent=0 // pred_fallthru
    _
  // Predicated region
  $region26: #{weighted_l1_loss.1} parent=0 // pred_check
    _
  $region27: #{weighted_l1_loss.1} parent=0 // pred_check_branch
    %148 = sbr.rel (0) target = $region29
  $region28: #{weighted_l1_loss.1} parent=0 // pred_region
    _
  $region29: #{weighted_l1_loss.1} parent=0 // pred_fallthru
    _

</llo_original>
